<compile_context>
chip_gen: v6e
topology: v6e:2x2x1
jax: 0.10.0
libtpu: 0.0.40
codegen_flags: <defaults>
</compile_context>

<pallas_src>
import functools

import jax
import jax.numpy as jnp
from jax.experimental import pallas as pl
from jax.experimental.pallas import tpu as pltpu


def _round_up(x, m):
    return -(-x // m) * m


def temporal_block_kernel(x_ref, mask_ref, w1_ref, w2_ref, wd_ref,
                          b1_ref, b2_ref, bd_ref, o_ref, *,
                          kernel_size, dilation, pad):
    """One batch chunk per grid step; its sequences are fused along lanes.

    x_ref    : (1, Cin_p, WX)   margin-padded fused input (matmul dtype)
    mask_ref : (1, W1)          1.0 on columns of the conv1 grid that carry
                                real y1 data, 0.0 on padding/margin columns
    w1_ref   : (K, Cout_p, Cin_p)   per-tap conv1 weights
    w2_ref   : (K, Cout_p, Cout_p)  per-tap conv2 weights
    wd_ref   : (Cout_p, Cin_p)      1x1 downsample weights
    b*_ref   : (Cout_p, 1) f32      biases
    o_ref    : (1, Cout_p, W)       fused output grid (W multiple of 128)
    """
    f32 = jnp.float32
    x = x_ref[0]                           # (Cin_p, WX)
    mask = mask_ref[...]                   # (1, W1)  f32
    w1g = mask.shape[-1]                   # conv1-grid width
    wo = o_ref.shape[-1]                   # output-grid width

    # ---- conv1: K accumulating per-tap MXU matmuls on shifted views ----
    acc1 = None
    for k in range(kernel_size):
        xk = x[:, k * dilation:k * dilation + w1g]
        p = jnp.dot(w1_ref[k], xk, preferred_element_type=f32)
        acc1 = p if acc1 is None else acc1 + p
    # relu1 + bias; dropout1 = identity (eval).  The mask reproduces exactly
    # the zero padding conv2 must see between fused sequences / at the ends.
    out1 = (jnp.maximum(acc1 + b1_ref[...], 0.0) * mask).astype(x.dtype)

    # ---- conv2: K accumulating per-tap MXU matmuls on the live out1 ----
    acc2 = None
    for k in range(kernel_size):
        ok = out1[:, k * dilation:k * dilation + wo]
        p = jnp.dot(w2_ref[k], ok, preferred_element_type=f32)
        acc2 = p if acc2 is None else acc2 + p
    out2 = jnp.maximum(acc2 + b2_ref[...], 0.0)      # relu2; dropout2 = id

    # ---- residual (1x1 downsample) directly on the output grid ----
    res = jnp.dot(wd_ref[...], x[:, 2 * pad:2 * pad + wo],
                  preferred_element_type=f32) + bd_ref[...]

    o_ref[0] = jnp.maximum(out2 + res, 0.0).astype(o_ref.dtype)


def temporal_block(x, w1, b1, w2, b2, wd, bd, *, kernel_size, dilation,
                   batch_chunk=1, matmul_dtype=jnp.bfloat16):
    """x: (B, Cin, L).  Weights in PyTorch layout:
       w1 (Cout, Cin, K), w2 (Cout, Cout, K), wd (Cout, Cin, 1) or None."""
    B, Cin, L = x.shape
    Cout = w1.shape[0]
    K = kernel_size
    assert (K - 1) * dilation % 2 == 0, (
        "this module's symmetric padding needs (K-1)*dilation even")
    pad = (K - 1) * dilation // 2

    bc = max(1, min(batch_chunk, B))
    assert B % bc == 0
    G = B // bc                                     # grid steps (>=2 for B>=2)

    f32 = jnp.float32
    cdt = matmul_dtype
    itm = jnp.dtype(cdt).itemsize

    Cin_p = _round_up(Cin, 16)                      # sublane-tile aligned taps
    Cout_p = _round_up(Cout, 16)

    S = _round_up(L + 2 * pad, 128)                 # per-sequence lane stride
    W = bc * S                                      # output width (mult of 128)
    M = _round_up(2 * pad, 128)                     # halo margin
    W1 = W + M                                      # conv1-grid width
    WX = W + 2 * M                                  # padded input width

    # ---- activations: batch chunk fused into the lane axis --------------
    # Per sequence: [2*pad zeros | L data | zeros to S]; plus 2*M zero tail.
    xg = x.reshape(G, bc, Cin, L).transpose(0, 2, 1, 3)          # (G,Cin,bc,L)
    xg = jnp.pad(xg, ((0, 0), (0, Cin_p - Cin), (0, 0),
                      (2 * pad, S - L - 2 * pad)))               # (G,Cin_p,bc,S)
    x_big = jnp.pad(xg.reshape(G, Cin_p, W),
                    ((0, 0), (0, 0), (0, 2 * M))).astype(cdt)    # (G,Cin_p,WX)

    # ---- mask: 1.0 where the conv1 grid carries real y1 data ------------
    seg = jnp.concatenate([jnp.zeros((pad,), f32), jnp.ones((L,), f32),
                           jnp.zeros((S - pad - L,), f32)])
    mask = jnp.concatenate([jnp.tile(seg, bc),
                            jnp.zeros((M,), f32)]).reshape(1, W1)

    # ---- weights: per-tap, channel-padded, matmul dtype ------------------
    w1p = jnp.pad(jnp.transpose(w1, (2, 0, 1)).astype(f32),
                  ((0, 0), (0, Cout_p - Cout), (0, Cin_p - Cin))).astype(cdt)
    w2p = jnp.pad(jnp.transpose(w2, (2, 0, 1)).astype(f32),
                  ((0, 0), (0, Cout_p - Cout), (0, Cout_p - Cout))).astype(cdt)
    if wd is None:                                  # identity residual path
        assert Cin == Cout, "identity residual requires n_inputs == n_outputs"
        wd2d = jnp.eye(Cin, dtype=f32)
        bdv = jnp.zeros((Cout,), f32)
    else:
        wd2d = wd[:, :, 0].astype(f32)
        bdv = bd.astype(f32)
    wdp = jnp.pad(wd2d, ((0, Cout_p - Cout), (0, Cin_p - Cin))).astype(cdt)

    b1p = jnp.pad(b1.astype(f32), (0, Cout_p - Cout)).reshape(Cout_p, 1)
    b2p = jnp.pad(b2.astype(f32), (0, Cout_p - Cout)).reshape(Cout_p, 1)
    bdp = jnp.pad(bdv, (0, Cout_p - Cout)).reshape(Cout_p, 1)

    # ---- VMEM budget (v7x: 64 MiB physical / 32 MiB scoped default) -----
    step_bytes = (2 * Cin_p * WX * itm              # double-buffered input
                  + 2 * Cout_p * W * 4              # double-buffered output
                  + 4 * Cout_p * W1 * 4             # acc1 / out1 temporaries
                  + 4 * Cout_p * W * 4              # acc2 / res / out2
                  + 2 * Cin_p * W1 * itm)           # shifted conv1 views
    vmem_limit = int(min(64 * 2 ** 20, max(16 * 2 ** 20, 2 * step_bytes)))

    kernel = functools.partial(temporal_block_kernel, kernel_size=K,
                               dilation=dilation, pad=pad)

    out_fused = pl.pallas_call(
        kernel,
        out_shape=jax.ShapeDtypeStruct((G, Cout_p, W), x.dtype),
        grid_spec=pltpu.PrefetchScalarGridSpec(
            num_scalar_prefetch=0,
            grid=(G,),
            in_specs=[
                pl.BlockSpec((1, Cin_p, WX), lambda g: (g, 0, 0)),
                pl.BlockSpec((1, W1), lambda g: (0, 0)),
                pl.BlockSpec((K, Cout_p, Cin_p), lambda g: (0, 0, 0)),
                pl.BlockSpec((K, Cout_p, Cout_p), lambda g: (0, 0, 0)),
                pl.BlockSpec((Cout_p, Cin_p), lambda g: (0, 0)),
                pl.BlockSpec((Cout_p, 1), lambda g: (0, 0)),
                pl.BlockSpec((Cout_p, 1), lambda g: (0, 0)),
                pl.BlockSpec((Cout_p, 1), lambda g: (0, 0)),
            ],
            out_specs=pl.BlockSpec((1, Cout_p, W), lambda g: (g, 0, 0)),
        ),
        compiler_params=pltpu.CompilerParams(
            dimension_semantics=("parallel",),
            vmem_limit_bytes=vmem_limit),
    )(x_big, mask, w1p, w2p, wdp, b1p, b2p, bdp)

    # Layout plumbing back to PyTorch's (B, Cout, L).
    out = out_fused[:, :Cout, :].reshape(G, Cout, bc, S)[:, :, :, :L]
    return out.transpose(0, 2, 1, 3).reshape(B, Cout, L)


def temporal_block_ref(x, w1, b1, w2, b2, wd, bd, *, kernel_size, dilation):
    """Plain-JAX f32 reference with the module's math (for verification)."""
    pad = (kernel_size - 1) * dilation // 2
    L = x.shape[-1]

    def conv1d(inp, w, b):
        ip = jnp.pad(inp, ((0, 0), (0, 0), (pad, pad)))
        acc = 0.0
        for k in range(kernel_size):
            acc = acc + jnp.einsum('oc,bcl->bol', w[:, :, k],
                                   ip[:, :, k * dilation:k * dilation + L])
        return acc + b[None, :, None]

    out = jax.nn.relu(conv1d(x, w1, b1))
    out = jax.nn.relu(conv1d(out, w2, b2))
    res = jnp.einsum('oc,bcl->bol', wd[:, :, 0], x) + bd[None, :, None]
    return jax.nn.relu(out + res)


if __name__ == "__main__":
    # Module config: n_inputs=4, n_outputs=8, kernel_size=3, stride=1, dilation=2
    B, Cin, Cout, L, K, DIL = 2, 4, 8, 16, 3, 2

    key = jax.random.PRNGKey(0)
    kx, k1, kb1, k2, kb2, kd, kbd = jax.random.split(key, 7)

    x = jax.random.normal(kx, (B, Cin, L), dtype=jnp.float32)
    w1 = jax.random.normal(k1, (Cout, Cin, K), dtype=jnp.float32) * 0.2
    b1 = jax.random.normal(kb1, (Cout,), dtype=jnp.float32) * 0.1
    w2 = jax.random.normal(k2, (Cout, Cout, K), dtype=jnp.float32) * 0.2
    b2 = jax.random.normal(kb2, (Cout,), dtype=jnp.float32) * 0.1
    wd = jax.random.normal(kd, (Cout, Cin, 1), dtype=jnp.float32) * 0.2
    bd = jax.random.normal(kbd, (Cout,), dtype=jnp.float32) * 0.1

    ref = temporal_block_ref(x, w1, b1, w2, b2, wd, bd,
                             kernel_size=K, dilation=DIL)

    # f32-operand run: exact structural check against the reference.
    out_f32 = jax.block_until_ready(
        temporal_block(x, w1, b1, w2, b2, wd, bd, kernel_size=K,
                       dilation=DIL, matmul_dtype=jnp.float32))
    assert out_f32.shape == (B, Cout, L)
    assert jnp.allclose(out_f32, ref, atol=1e-4, rtol=1e-4), "f32 mismatch"

    # bf16-operand run (production path): MXU-native operands, f32 accumulate.
    out_bf16 = jax.block_until_ready(
        temporal_block(x, w1, b1, w2, b2, wd, bd, kernel_size=K,
                       dilation=DIL, matmul_dtype=jnp.bfloat16))
    assert out_bf16.shape == (B, Cout, L)
    assert jnp.allclose(out_bf16, ref, atol=3e-2, rtol=3e-2), "bf16 mismatch"

    print("KERNEL_OK")
</pallas_src>

<mosaic_0001>
module attributes {stable_mosaic.version = 11 : i64} {
  func.func @temporal_block_kernel(%arg0: i32, %arg1: memref<1x16x384xf32, #tpu.memory_space<vmem>>, %arg2: memref<1x256xf32, #tpu.memory_space<vmem>>, %arg3: memref<3x16x16xf32, #tpu.memory_space<vmem>>, %arg4: memref<3x16x16xf32, #tpu.memory_space<vmem>>, %arg5: memref<16x16xf32, #tpu.memory_space<vmem>>, %arg6: memref<16x1xf32, #tpu.memory_space<vmem>>, %arg7: memref<16x1xf32, #tpu.memory_space<vmem>>, %arg8: memref<16x1xf32, #tpu.memory_space<vmem>>, %arg9: memref<1x16x128xf32, #tpu.memory_space<vmem>>) attributes {dimension_semantics = [#tpu.dimension_semantics<parallel>], iteration_bounds = array<i64: 2>, scalar_prefetch = 0 : i64, scratch_operands = 0 : i64, tpu.core_type = #tpu.core_type<tc>, window_params = [{transform_indices = @transform_0, window_bounds = array<i64: 1, 16, 384>}, {pipeline_mode = #tpu.pipeline_mode<synchronous>, transform_indices = @transform_1, window_bounds = array<i64: 1, 256>}, {pipeline_mode = #tpu.pipeline_mode<synchronous>, transform_indices = @transform_2, window_bounds = array<i64: 3, 16, 16>}, {pipeline_mode = #tpu.pipeline_mode<synchronous>, transform_indices = @transform_3, window_bounds = array<i64: 3, 16, 16>}, {pipeline_mode = #tpu.pipeline_mode<synchronous>, transform_indices = @transform_4, window_bounds = array<i64: 16, 16>}, {pipeline_mode = #tpu.pipeline_mode<synchronous>, transform_indices = @transform_5, window_bounds = array<i64: 16, 1>}, {pipeline_mode = #tpu.pipeline_mode<synchronous>, transform_indices = @transform_6, window_bounds = array<i64: 16, 1>}, {pipeline_mode = #tpu.pipeline_mode<synchronous>, transform_indices = @transform_7, window_bounds = array<i64: 16, 1>}, {transform_indices = @transform_8, window_bounds = array<i64: 1, 16, 128>}]} {
    %c0 = arith.constant 0 : index
    %c0_0 = arith.constant 0 : index
    %c0_1 = arith.constant 0 : index
    %0 = vector.load %arg1[%c0, %c0_0, %c0_1] : memref<1x16x384xf32, #tpu.memory_space<vmem>>, vector<1x16x384xf32>
    %1 = vector.shape_cast %0 : vector<1x16x384xf32> to vector<16x384xf32>
    %c0_2 = arith.constant 0 : index
    %c0_3 = arith.constant 0 : index
    %2 = vector.load %arg2[%c0_2, %c0_3] : memref<1x256xf32, #tpu.memory_space<vmem>>, vector<1x256xf32>
    %3 = vector.extract_strided_slice %1 {offsets = [0, 0], sizes = [16, 256], strides = [1, 1]} : vector<16x384xf32> to vector<16x256xf32>
    %c0_4 = arith.constant 0 : index
    %c0_5 = arith.constant 0 : index
    %c0_6 = arith.constant 0 : index
    %4 = vector.load %arg3[%c0_4, %c0_5, %c0_6] : memref<3x16x16xf32, #tpu.memory_space<vmem>>, vector<1x16x16xf32>
    %5 = vector.shape_cast %4 : vector<1x16x16xf32> to vector<16x16xf32>
    %cst = arith.constant dense<0.000000e+00> : vector<16x256xf32>
    %6 = tpu.matmul %5, %3, %cst {dimension_numbers = #tpu.dot_dimension_numbers<[1], [0], [0], [1], [0, 0, 1, 1], [], []>} : vector<16x16xf32>, vector<16x256xf32>, vector<16x256xf32> -> vector<16x256xf32>
    %7 = vector.extract_strided_slice %1 {offsets = [0, 2], sizes = [16, 256], strides = [1, 1]} : vector<16x384xf32> to vector<16x256xf32>
    %c1 = arith.constant 1 : index
    %c0_7 = arith.constant 0 : index
    %c0_8 = arith.constant 0 : index
    %8 = vector.load %arg3[%c1, %c0_7, %c0_8] : memref<3x16x16xf32, #tpu.memory_space<vmem>>, vector<1x16x16xf32>
    %9 = vector.shape_cast %8 : vector<1x16x16xf32> to vector<16x16xf32>
    %cst_9 = arith.constant dense<0.000000e+00> : vector<16x256xf32>
    %10 = tpu.matmul %9, %7, %cst_9 {dimension_numbers = #tpu.dot_dimension_numbers<[1], [0], [0], [1], [0, 0, 1, 1], [], []>} : vector<16x16xf32>, vector<16x256xf32>, vector<16x256xf32> -> vector<16x256xf32>
    %11 = arith.addf %6, %10 : vector<16x256xf32>
    %12 = vector.extract_strided_slice %1 {offsets = [0, 4], sizes = [16, 256], strides = [1, 1]} : vector<16x384xf32> to vector<16x256xf32>
    %c2 = arith.constant 2 : index
    %c0_10 = arith.constant 0 : index
    %c0_11 = arith.constant 0 : index
    %13 = vector.load %arg3[%c2, %c0_10, %c0_11] : memref<3x16x16xf32, #tpu.memory_space<vmem>>, vector<1x16x16xf32>
    %14 = vector.shape_cast %13 : vector<1x16x16xf32> to vector<16x16xf32>
    %cst_12 = arith.constant dense<0.000000e+00> : vector<16x256xf32>
    %15 = tpu.matmul %14, %12, %cst_12 {dimension_numbers = #tpu.dot_dimension_numbers<[1], [0], [0], [1], [0, 0, 1, 1], [], []>} : vector<16x16xf32>, vector<16x256xf32>, vector<16x256xf32> -> vector<16x256xf32>
    %16 = arith.addf %11, %15 : vector<16x256xf32>
    %c0_13 = arith.constant 0 : index
    %c0_14 = arith.constant 0 : index
    %17 = vector.load %arg6[%c0_13, %c0_14] : memref<16x1xf32, #tpu.memory_space<vmem>>, vector<16x1xf32>
    %18 = vector.broadcast %17 : vector<16x1xf32> to vector<16x256xf32>
    %19 = arith.addf %16, %18 : vector<16x256xf32>
    %cst_15 = arith.constant 0.000000e+00 : f32
    %20 = vector.broadcast %cst_15 : f32 to vector<16x256xf32>
    %21 = arith.maximumf %19, %20 : vector<16x256xf32>
    %22 = vector.broadcast %2 : vector<1x256xf32> to vector<16x256xf32>
    %23 = arith.mulf %21, %22 : vector<16x256xf32>
    %24 = vector.extract_strided_slice %23 {offsets = [0, 0], sizes = [16, 128], strides = [1, 1]} : vector<16x256xf32> to vector<16x128xf32>
    %c0_16 = arith.constant 0 : index
    %c0_17 = arith.constant 0 : index
    %c0_18 = arith.constant 0 : index
    %25 = vector.load %arg4[%c0_16, %c0_17, %c0_18] : memref<3x16x16xf32, #tpu.memory_space<vmem>>, vector<1x16x16xf32>
    %26 = vector.shape_cast %25 : vector<1x16x16xf32> to vector<16x16xf32>
    %cst_19 = arith.constant dense<0.000000e+00> : vector<16x128xf32>
    %27 = tpu.matmul %26, %24, %cst_19 {dimension_numbers = #tpu.dot_dimension_numbers<[1], [0], [0], [1], [0, 0, 1, 1], [], []>} : vector<16x16xf32>, vector<16x128xf32>, vector<16x128xf32> -> vector<16x128xf32>
    %28 = vector.extract_strided_slice %23 {offsets = [0, 2], sizes = [16, 128], strides = [1, 1]} : vector<16x256xf32> to vector<16x128xf32>
    %c1_20 = arith.constant 1 : index
    %c0_21 = arith.constant 0 : index
    %c0_22 = arith.constant 0 : index
    %29 = vector.load %arg4[%c1_20, %c0_21, %c0_22] : memref<3x16x16xf32, #tpu.memory_space<vmem>>, vector<1x16x16xf32>
    %30 = vector.shape_cast %29 : vector<1x16x16xf32> to vector<16x16xf32>
    %cst_23 = arith.constant dense<0.000000e+00> : vector<16x128xf32>
    %31 = tpu.matmul %30, %28, %cst_23 {dimension_numbers = #tpu.dot_dimension_numbers<[1], [0], [0], [1], [0, 0, 1, 1], [], []>} : vector<16x16xf32>, vector<16x128xf32>, vector<16x128xf32> -> vector<16x128xf32>
    %32 = arith.addf %27, %31 : vector<16x128xf32>
    %33 = vector.extract_strided_slice %23 {offsets = [0, 4], sizes = [16, 128], strides = [1, 1]} : vector<16x256xf32> to vector<16x128xf32>
    %c2_24 = arith.constant 2 : index
    %c0_25 = arith.constant 0 : index
    %c0_26 = arith.constant 0 : index
    %34 = vector.load %arg4[%c2_24, %c0_25, %c0_26] : memref<3x16x16xf32, #tpu.memory_space<vmem>>, vector<1x16x16xf32>
    %35 = vector.shape_cast %34 : vector<1x16x16xf32> to vector<16x16xf32>
    %cst_27 = arith.constant dense<0.000000e+00> : vector<16x128xf32>
    %36 = tpu.matmul %35, %33, %cst_27 {dimension_numbers = #tpu.dot_dimension_numbers<[1], [0], [0], [1], [0, 0, 1, 1], [], []>} : vector<16x16xf32>, vector<16x128xf32>, vector<16x128xf32> -> vector<16x128xf32>
    %37 = arith.addf %32, %36 : vector<16x128xf32>
    %c0_28 = arith.constant 0 : index
    %c0_29 = arith.constant 0 : index
    %38 = vector.load %arg7[%c0_28, %c0_29] : memref<16x1xf32, #tpu.memory_space<vmem>>, vector<16x1xf32>
    %39 = vector.broadcast %38 : vector<16x1xf32> to vector<16x128xf32>
    %40 = arith.addf %37, %39 : vector<16x128xf32>
    %cst_30 = arith.constant 0.000000e+00 : f32
    %41 = vector.broadcast %cst_30 : f32 to vector<16x128xf32>
    %42 = arith.maximumf %40, %41 : vector<16x128xf32>
    %c0_31 = arith.constant 0 : index
    %c0_32 = arith.constant 0 : index
    %43 = vector.load %arg5[%c0_31, %c0_32] : memref<16x16xf32, #tpu.memory_space<vmem>>, vector<16x16xf32>
    %44 = vector.extract_strided_slice %1 {offsets = [0, 4], sizes = [16, 128], strides = [1, 1]} : vector<16x384xf32> to vector<16x128xf32>
    %cst_33 = arith.constant dense<0.000000e+00> : vector<16x128xf32>
    %45 = tpu.matmul %43, %44, %cst_33 {dimension_numbers = #tpu.dot_dimension_numbers<[1], [0], [0], [1], [0, 0, 1, 1], [], []>} : vector<16x16xf32>, vector<16x128xf32>, vector<16x128xf32> -> vector<16x128xf32>
    %c0_34 = arith.constant 0 : index
    %c0_35 = arith.constant 0 : index
    %46 = vector.load %arg8[%c0_34, %c0_35] : memref<16x1xf32, #tpu.memory_space<vmem>>, vector<16x1xf32>
    %47 = vector.broadcast %46 : vector<16x1xf32> to vector<16x128xf32>
    %48 = arith.addf %45, %47 : vector<16x128xf32>
    %49 = arith.addf %42, %48 : vector<16x128xf32>
    %cst_36 = arith.constant 0.000000e+00 : f32
    %50 = vector.broadcast %cst_36 : f32 to vector<16x128xf32>
    %51 = arith.maximumf %49, %50 : vector<16x128xf32>
    %c0_37 = arith.constant 0 : index
    %c0_38 = arith.constant 0 : index
    %c0_39 = arith.constant 0 : index
    %52 = vector.load %arg9[%c0_37, %c0_38, %c0_39] : memref<1x16x128xf32, #tpu.memory_space<vmem>>, vector<1x16x128xf32>
    %53 = vector.shape_cast %52 : vector<1x16x128xf32> to vector<16x128xf32>
    %54 = vector.shape_cast %51 : vector<16x128xf32> to vector<1x16x128xf32>
    tpu.vector_store %arg9[%c0_37, %c0_38, %c0_39], %54 {strides = array<i32>} : memref<1x16x128xf32, #tpu.memory_space<vmem>>, vector<1x16x128xf32>,
    return
  }
  func.func @transform_0(%arg0: i32) -> (i32, i32, i32) {
    %c0_i32 = arith.constant 0 : i32
    %c0_i32_0 = arith.constant 0 : i32
    %c0_i32_1 = arith.constant 0 : i32
    return %arg0, %c0_i32, %c0_i32_0 : i32, i32, i32
  }
  func.func @transform_1(%arg0: i32) -> (i32, i32) {
    %c0_i32 = arith.constant 0 : i32
    %c0_i32_0 = arith.constant 0 : i32
    %c0_i32_1 = arith.constant 0 : i32
    return %c0_i32, %c0_i32_0 : i32, i32
  }
  func.func @transform_2(%arg0: i32) -> (i32, i32, i32) {
    %c0_i32 = arith.constant 0 : i32
    %c0_i32_0 = arith.constant 0 : i32
    %c0_i32_1 = arith.constant 0 : i32
    %c0_i32_2 = arith.constant 0 : i32
    return %c0_i32, %c0_i32_0, %c0_i32_1 : i32, i32, i32
  }
  func.func @transform_3(%arg0: i32) -> (i32, i32, i32) {
    %c0_i32 = arith.constant 0 : i32
    %c0_i32_0 = arith.constant 0 : i32
    %c0_i32_1 = arith.constant 0 : i32
    %c0_i32_2 = arith.constant 0 : i32
    return %c0_i32, %c0_i32_0, %c0_i32_1 : i32, i32, i32
  }
  func.func @transform_4(%arg0: i32) -> (i32, i32) {
    %c0_i32 = arith.constant 0 : i32
    %c0_i32_0 = arith.constant 0 : i32
    %c0_i32_1 = arith.constant 0 : i32
    return %c0_i32, %c0_i32_0 : i32, i32
  }
  func.func @transform_5(%arg0: i32) -> (i32, i32) {
    %c0_i32 = arith.constant 0 : i32
    %c0_i32_0 = arith.constant 0 : i32
    %c0_i32_1 = arith.constant 0 : i32
    return %c0_i32, %c0_i32_0 : i32, i32
  }
  func.func @transform_6(%arg0: i32) -> (i32, i32) {
    %c0_i32 = arith.constant 0 : i32
    %c0_i32_0 = arith.constant 0 : i32
    %c0_i32_1 = arith.constant 0 : i32
    return %c0_i32, %c0_i32_0 : i32, i32
  }
  func.func @transform_7(%arg0: i32) -> (i32, i32) {
    %c0_i32 = arith.constant 0 : i32
    %c0_i32_0 = arith.constant 0 : i32
    %c0_i32_1 = arith.constant 0 : i32
    return %c0_i32, %c0_i32_0 : i32, i32
  }
  func.func @transform_8(%arg0: i32) -> (i32, i32, i32) {
    %c0_i32 = arith.constant 0 : i32
    %c0_i32_0 = arith.constant 0 : i32
    %c0_i32_1 = arith.constant 0 : i32
    return %arg0, %c0_i32, %c0_i32_0 : i32, i32, i32
  }
}

</mosaic_0001>

<llo_original>
// kernel: tpu_custom_call.1
$region0: #{tpu_custom_call.1}
  #allocation0 [shape = 'u32[]', space=smem, size = 0x4, offset = 0x4, fixed_abs, tag = 'smem constant byte address 0x4 - core index']
  #allocation1 [shape = 'u32[144,128]{1,0:T(1,128)}', space=vmem, size = 0x12000, scoped, tag = 'internal scratch']
  %s0 = inlined_call_operand.hbm [shape: f32[2,16,384], index: 0, kind: input, shape index: {}]
  %s1 = inlined_call_operand.vmem [shape: f32[1,256], index: 1, kind: input, shape index: {}]
  %s2 = inlined_call_operand.vmem [shape: f32[3,16,16], index: 2, kind: input, shape index: {}]
  %s3 = inlined_call_operand.hbm [shape: f32[3,16,16], index: 3, kind: input, shape index: {}]
  %s4 = inlined_call_operand.hbm [shape: f32[16,16], index: 4, kind: input, shape index: {}]
  %s5 = inlined_call_operand.vmem [shape: f32[16,1], index: 5, kind: input, shape index: {}]
  %s6 = inlined_call_operand.vmem [shape: f32[16,1], index: 6, kind: input, shape index: {}]
  %s7 = inlined_call_operand.vmem [shape: f32[16,1], index: 7, kind: input, shape index: {}]
  %s8 = inlined_call_operand.hbm [shape: f32[2,16,128], index: 8, kind: output, shape index: {}]
  %s9 = sld [smem:[#allocation0]]
  $region77: #{tpu_custom_call.1} parent=0
    _
  %s11 = ssub.s32 1, %s9
  %s12 = scalar_select 0, %s11, %s9
  $region1: #{tpu_custom_call.1} parent=0
    #allocation2 [shape = 'u8[49152]{0}', space=vmem, size = 0xc000, scoped, tag = 'input window, operand 0']
    #allocation3 [shape = 's32[2]{0}', space=sflag, size = 0x8, scoped, tag = 'scoped memory for tpu_custom_call.1']
    #allocation4 [shape = 's32[2]{0}', space=sflag, size = 0x8, scoped, tag = 'scoped memory for tpu_custom_call.1']
    #allocation5 [shape = 'u8[24576]{0}', space=vmem, size = 0x6000, scoped, tag = 'input window, operand 3, single buffered']
    #allocation6 [shape = 's32[1]{0}', space=sflag, size = 0x4, scoped, tag = 'scoped memory for tpu_custom_call.1']
    #allocation7 [shape = 'u8[8192]{0}', space=vmem, size = 0x2000, scoped, tag = 'input window, operand 4, single buffered']
    #allocation8 [shape = 'u8[16384]{0}', space=vmem, size = 0x4000, scoped, tag = 'output window, operand 0']
    %13 = vsyncpa [#allocation3], 0
    %s14 = scalar_lea.sflag [#allocation3], 1
    %15 = vsyncpa %s14, 0
    %16 = vsyncpa [#allocation6], 0
    %17 = vsyncpa [#allocation4], 0
    %s18 = scalar_lea.sflag [#allocation4], 1
    %19 = vsyncpa %s18, 0
    loop: start=0, step=1, limit=4
    $region2: #{tpu_custom_call.1} parent=1 // loop_pre_header
      _
    $region3: #{tpu_custom_call.1} parent=1 // loop_header
      %s21 = sphi 0, %s25
      %p22 = scmp.ge.s32.totalorder %s21, 4
      %s31 = sphi 0, %s33
      %s34 = sphi 0, %s31
      %s35 = sphi 0, %s34
      %s51 = sphi 0, %s35
      %s55 = sphi 0, %s55
      %s57 = sphi 0, %s55
      %s58 = sphi 0, %s57
      %s72 = sphi 0, %s58
      %s76 = sphi 0, %s76
      %s78 = sphi 0, %s76
      %s79 = sphi 0, %s78
      %s93 = sphi 0, %s79
      %s97 = sphi 0, %s97
      %s99 = sphi 0, %s97
      %s100 = sphi 0, %s99
      %s114 = sphi 0, %s100
      %s118 = sphi 0, %s118
      %s120 = sphi 0, %s118
      %s121 = sphi 0, %s120
      %s135 = sphi 0, %s121
      %s139 = sphi 0, %s139
      %s141 = sphi 0, %s139
      %s142 = sphi 0, %s141
      %s156 = sphi 0, %s142
      %s160 = sphi 0, %s160
      %s162 = sphi 0, %s160
      %s163 = sphi 0, %s162
      %s177 = sphi 0, %s163
      %s181 = sphi 0, %s181
      %s183 = sphi 0, %s181
      %s184 = sphi 0, %s183
      %s198 = sphi 0, %s184
      %s204 = sphi 0, %s206
      %s207 = sphi 0, %s204
      %s208 = sphi 0, %s207
      %s224 = sphi 0, %s208
    $region4: #{tpu_custom_call.1} parent=1 // loop_header_branch
      %24 = sbr.rel (%p22) target = $region8
    $region5: #{tpu_custom_call.1} parent=1 // loop_body
      %s26 = ssub.s32 %s21, 1
      %s27 = ssub.s32 %s21, 2
      %s28 = sadd.s32 %s21, 1
      %s29 = ssub.s32 %s21, %s28
      %p30 = scmp.eq.s32.totalorder %s29, 0
      %s32 = sadd.s32 %s31, 1
      %s33 = scalar_select %p30, %s31, %s32
      %p36 = pneg %p30
      %p37 = scmp.eq.s32.totalorder %s21, 1
      %p38 = por %p36, %p37
      %p39 = scmp.ne.s32.totalorder %s31, %s34
      %p40 = scmp.eq.s32.totalorder %s21, 0
      %p41 = por %p39, %p40
      %p42 = scmp.ne.s32.totalorder %s31, %s34
      %p43 = scmp.eq.s32.totalorder %s26, 1
      %p44 = por %p42, %p43
      %p45 = scmp.ne.s32.totalorder %s34, %s35
      %p46 = scmp.eq.s32.totalorder %s26, 0
      %p47 = por %p45, %p46
      %p48 = scmp.ne.s32.totalorder %s34, %s35
      %p49 = scmp.eq.s32.totalorder %s27, 1
      %p50 = por %p48, %p49
      %p52 = scmp.ne.s32.totalorder %s35, %s51
      %p53 = scmp.eq.s32.totalorder %s27, 0
      %p54 = por %p52, %p53
      %s56 = sadd.s32 %s55, 1
      %p59 = scmp.eq.s32.totalorder %s21, 1
      %p60 = scmp.ne.s32.totalorder %s55, %s57
      %p61 = scmp.eq.s32.totalorder %s21, 0
      %p62 = por %p60, %p61
      %p63 = scmp.ne.s32.totalorder %s55, %s57
      %p64 = scmp.eq.s32.totalorder %s26, 1
      %p65 = por %p63, %p64
      %p66 = scmp.ne.s32.totalorder %s57, %s58
      %p67 = scmp.eq.s32.totalorder %s26, 0
      %p68 = por %p66, %p67
      %p69 = scmp.ne.s32.totalorder %s57, %s58
      %p70 = scmp.eq.s32.totalorder %s27, 1
      %p71 = por %p69, %p70
      %p73 = scmp.ne.s32.totalorder %s58, %s72
      %p74 = scmp.eq.s32.totalorder %s27, 0
      %p75 = por %p73, %p74
      %s77 = sadd.s32 %s76, 1
      %p80 = scmp.eq.s32.totalorder %s21, 1
      %p81 = scmp.ne.s32.totalorder %s76, %s78
      %p82 = scmp.eq.s32.totalorder %s21, 0
      %p83 = por %p81, %p82
      %p84 = scmp.ne.s32.totalorder %s76, %s78
      %p85 = scmp.eq.s32.totalorder %s26, 1
      %p86 = por %p84, %p85
      %p87 = scmp.ne.s32.totalorder %s78, %s79
      %p88 = scmp.eq.s32.totalorder %s26, 0
      %p89 = por %p87, %p88
      %p90 = scmp.ne.s32.totalorder %s78, %s79
      %p91 = scmp.eq.s32.totalorder %s27, 1
      %p92 = por %p90, %p91
      %p94 = scmp.ne.s32.totalorder %s79, %s93
      %p95 = scmp.eq.s32.totalorder %s27, 0
      %p96 = por %p94, %p95
      %s98 = sadd.s32 %s97, 1
      %p101 = scmp.eq.s32.totalorder %s21, 1
      %p102 = scmp.ne.s32.totalorder %s97, %s99
      %p103 = scmp.eq.s32.totalorder %s21, 0
      %p104 = por %p102, %p103
      %p105 = scmp.ne.s32.totalorder %s97, %s99
      %p106 = scmp.eq.s32.totalorder %s26, 1
      %p107 = por %p105, %p106
      %p108 = scmp.ne.s32.totalorder %s99, %s100
      %p109 = scmp.eq.s32.totalorder %s26, 0
      %p110 = por %p108, %p109
      %p111 = scmp.ne.s32.totalorder %s99, %s100
      %p112 = scmp.eq.s32.totalorder %s27, 1
      %p113 = por %p111, %p112
      %p115 = scmp.ne.s32.totalorder %s100, %s114
      %p116 = scmp.eq.s32.totalorder %s27, 0
      %p117 = por %p115, %p116
      %s119 = sadd.s32 %s118, 1
      %p122 = scmp.eq.s32.totalorder %s21, 1
      %p123 = scmp.ne.s32.totalorder %s118, %s120
      %p124 = scmp.eq.s32.totalorder %s21, 0
      %p125 = por %p123, %p124
      %p126 = scmp.ne.s32.totalorder %s118, %s120
      %p127 = scmp.eq.s32.totalorder %s26, 1
      %p128 = por %p126, %p127
      %p129 = scmp.ne.s32.totalorder %s120, %s121
      %p130 = scmp.eq.s32.totalorder %s26, 0
      %p131 = por %p129, %p130
      %p132 = scmp.ne.s32.totalorder %s120, %s121
      %p133 = scmp.eq.s32.totalorder %s27, 1
      %p134 = por %p132, %p133
      %p136 = scmp.ne.s32.totalorder %s121, %s135
      %p137 = scmp.eq.s32.totalorder %s27, 0
      %p138 = por %p136, %p137
      %s140 = sadd.s32 %s139, 1
      %p143 = scmp.eq.s32.totalorder %s21, 1
      %p144 = scmp.ne.s32.totalorder %s139, %s141
      %p145 = scmp.eq.s32.totalorder %s21, 0
      %p146 = por %p144, %p145
      %p147 = scmp.ne.s32.totalorder %s139, %s141
      %p148 = scmp.eq.s32.totalorder %s26, 1
      %p149 = por %p147, %p148
      %p150 = scmp.ne.s32.totalorder %s141, %s142
      %p151 = scmp.eq.s32.totalorder %s26, 0
      %p152 = por %p150, %p151
      %p153 = scmp.ne.s32.totalorder %s141, %s142
      %p154 = scmp.eq.s32.totalorder %s27, 1
      %p155 = por %p153, %p154
      %p157 = scmp.ne.s32.totalorder %s142, %s156
      %p158 = scmp.eq.s32.totalorder %s27, 0
      %p159 = por %p157, %p158
      %s161 = sadd.s32 %s160, 1
      %p164 = scmp.eq.s32.totalorder %s21, 1
      %p165 = scmp.ne.s32.totalorder %s160, %s162
      %p166 = scmp.eq.s32.totalorder %s21, 0
      %p167 = por %p165, %p166
      %p168 = scmp.ne.s32.totalorder %s160, %s162
      %p169 = scmp.eq.s32.totalorder %s26, 1
      %p170 = por %p168, %p169
      %p171 = scmp.ne.s32.totalorder %s162, %s163
      %p172 = scmp.eq.s32.totalorder %s26, 0
      %p173 = por %p171, %p172
      %p174 = scmp.ne.s32.totalorder %s162, %s163
      %p175 = scmp.eq.s32.totalorder %s27, 1
      %p176 = por %p174, %p175
      %p178 = scmp.ne.s32.totalorder %s163, %s177
      %p179 = scmp.eq.s32.totalorder %s27, 0
      %p180 = por %p178, %p179
      %s182 = sadd.s32 %s181, 1
      %p185 = scmp.eq.s32.totalorder %s21, 1
      %p186 = scmp.ne.s32.totalorder %s181, %s183
      %p187 = scmp.eq.s32.totalorder %s21, 0
      %p188 = por %p186, %p187
      %p189 = scmp.ne.s32.totalorder %s181, %s183
      %p190 = scmp.eq.s32.totalorder %s26, 1
      %p191 = por %p189, %p190
      %p192 = scmp.ne.s32.totalorder %s183, %s184
      %p193 = scmp.eq.s32.totalorder %s26, 0
      %p194 = por %p192, %p193
      %p195 = scmp.ne.s32.totalorder %s183, %s184
      %p196 = scmp.eq.s32.totalorder %s27, 1
      %p197 = por %p195, %p196
      %p199 = scmp.ne.s32.totalorder %s184, %s198
      %p200 = scmp.eq.s32.totalorder %s27, 0
      %p201 = por %p199, %p200
      %s202 = ssub.s32 %s21, %s28
      %p203 = scmp.eq.s32.totalorder %s202, 0
      %s205 = sadd.s32 %s204, 1
      %s206 = scalar_select %p203, %s204, %s205
      %p209 = pneg %p203
      %p210 = scmp.eq.s32.totalorder %s21, 1
      %p211 = por %p209, %p210
      %p212 = scmp.ne.s32.totalorder %s204, %s207
      %p213 = scmp.eq.s32.totalorder %s21, 0
      %p214 = por %p212, %p213
      %p215 = scmp.ne.s32.totalorder %s204, %s207
      %p216 = scmp.eq.s32.totalorder %s26, 1
      %p217 = por %p215, %p216
      %p218 = scmp.ne.s32.totalorder %s207, %s208
      %p219 = scmp.eq.s32.totalorder %s26, 0
      %p220 = por %p218, %p219
      %p221 = scmp.ne.s32.totalorder %s207, %s208
      %p222 = scmp.eq.s32.totalorder %s27, 1
      %p223 = por %p221, %p222
      %p225 = scmp.ne.s32.totalorder %s208, %s224
      %p226 = scmp.eq.s32.totalorder %s27, 0
      %p227 = por %p225, %p226
      %p228 = scmp.le.s32.totalorder 1, %s21
      %p229 = scmp.lt.s32.totalorder %s21, 3
      %p230 = pnand %p228, %p229
      %p231 = pneg %p230
      // Predicated region
      $region9: #{tpu_custom_call.1} parent=5 // pred_check
        _
      $region10: #{tpu_custom_call.1} parent=5 // pred_check_branch
        %233 = sbr.rel (%p230) target = $region12
      $region11: #{tpu_custom_call.1} parent=5 // pred_region
        %s234 = ssub.s32 %s21, 1
        // Predicated region
        $region13: #{tpu_custom_call.1} parent=11 // pred_check
          %p235 = pneg %p68
        $region14: #{tpu_custom_call.1} parent=11 // pred_check_branch
          %237 = sbr.rel (%p235) target = $region16
        $region15: #{tpu_custom_call.1} parent=11 // pred_region
          _
        $region16: #{tpu_custom_call.1} parent=11 // pred_fallthru
          _
        // Predicated region
        $region17: #{tpu_custom_call.1} parent=11 // pred_check
          %p238 = pneg %p89
        $region18: #{tpu_custom_call.1} parent=11 // pred_check_branch
          %240 = sbr.rel (%p238) target = $region20
        $region19: #{tpu_custom_call.1} parent=11 // pred_region
          _
        $region20: #{tpu_custom_call.1} parent=11 // pred_fallthru
          _
        // Predicated region
        $region21: #{tpu_custom_call.1} parent=11 // pred_check
          %p241 = pneg %p110
        $region22: #{tpu_custom_call.1} parent=11 // pred_check_branch
          %243 = sbr.rel (%p241) target = $region24
        $region23: #{tpu_custom_call.1} parent=11 // pred_region
          %s245 = ssub.s32 768, 768
          %246 = vsyncadd [#allocation6], %s245
          %s247 = sshll.u32 [#allocation5], 4
          %s248 = int_to_ptr.vmem [resolvable:$true] %s247
          %253 = dma.hbm_to_vmem [thread:$0]  %s3, 768, %s248, [#allocation6], 128, 128, 8
        $region24: #{tpu_custom_call.1} parent=11 // pred_fallthru
          _
        // Predicated region
        $region25: #{tpu_custom_call.1} parent=11 // pred_check
          %p254 = pneg %p131
        $region26: #{tpu_custom_call.1} parent=11 // pred_check_branch
          %256 = sbr.rel (%p254) target = $region28
        $region27: #{tpu_custom_call.1} parent=11 // pred_region
          %s258 = ssub.s32 256, 256
          %259 = vsyncadd [#allocation6], %s258
          %s260 = sshll.u32 [#allocation7], 4
          %s261 = int_to_ptr.vmem [resolvable:$true] %s260
          %266 = dma.hbm_to_vmem [thread:$0]  %s4, 256, %s261, [#allocation6], 128, 128, 8
        $region28: #{tpu_custom_call.1} parent=11 // pred_fallthru
          _
        // Predicated region
        $region29: #{tpu_custom_call.1} parent=11 // pred_check
          %p267 = pneg %p152
        $region30: #{tpu_custom_call.1} parent=11 // pred_check_branch
          %269 = sbr.rel (%p267) target = $region32
        $region31: #{tpu_custom_call.1} parent=11 // pred_region
          _
        $region32: #{tpu_custom_call.1} parent=11 // pred_fallthru
          _
        // Predicated region
        $region33: #{tpu_custom_call.1} parent=11 // pred_check
          %p270 = pneg %p173
        $region34: #{tpu_custom_call.1} parent=11 // pred_check_branch
          %272 = sbr.rel (%p270) target = $region36
        $region35: #{tpu_custom_call.1} parent=11 // pred_region
          _
        $region36: #{tpu_custom_call.1} parent=11 // pred_fallthru
          _
        // Predicated region
        $region37: #{tpu_custom_call.1} parent=11 // pred_check
          %p273 = pneg %p194
        $region38: #{tpu_custom_call.1} parent=11 // pred_check_branch
          %275 = sbr.rel (%p273) target = $region40
        $region39: #{tpu_custom_call.1} parent=11 // pred_region
          _
        $region40: #{tpu_custom_call.1} parent=11 // pred_fallthru
          _
      $region12: #{tpu_custom_call.1} parent=5 // pred_fallthru
        _
      %p276 = scmp.lt.s32.totalorder %s21, 2
      // Predicated region
      $region41: #{tpu_custom_call.1} parent=5 // pred_check
        %p277 = pneg %p276
      $region42: #{tpu_custom_call.1} parent=5 // pred_check_branch
        %279 = sbr.rel (%p277) target = $region44
      $region43: #{tpu_custom_call.1} parent=5 // pred_region
        // Predicated region
        $region45: #{tpu_custom_call.1} parent=43 // pred_check
          %p280 = pneg %p41
        $region46: #{tpu_custom_call.1} parent=43 // pred_check_branch
          %282 = sbr.rel (%p280) target = $region48
        $region47: #{tpu_custom_call.1} parent=43 // pred_region
          %s283 = sand.u32 %s31, 1
          %s284 = scalar_lea.sflag [#allocation3], %s283
          %s285 = sand.u32 %s31, 1
          %s286 = smul.addr %s285, 48
          %s287 = scalar_lea.vmem [#allocation2], %s286
          %s289 = ssub.s32 768, 768
          %290 = vsyncadd %s284, %s289
          %s291 = smul.addr %s21, 6
          %s292 = smul.addr %s291, 128
          %s293 = scalar_lea.hbm %s0, %s292
          %s294 = sshll.u32 %s287, 4
          %s295 = int_to_ptr.vmem [resolvable:$true] %s294
          %300 = dma.hbm_to_vmem [thread:$0]  %s293, 768, %s295, %s284, 384, 384, 24
        $region48: #{tpu_custom_call.1} parent=43 // pred_fallthru
          _
      $region44: #{tpu_custom_call.1} parent=5 // pred_fallthru
        _
      %p301 = scmp.le.s32.totalorder 1, %s21
      %p302 = scmp.lt.s32.totalorder %s21, 3
      %p303 = pnand %p301, %p302
      %p304 = pneg %p303
      // Predicated region
      $region49: #{tpu_custom_call.1} parent=5 // pred_check
        _
      $region50: #{tpu_custom_call.1} parent=5 // pred_check_branch
        %306 = sbr.rel (%p303) target = $region52
      $region51: #{tpu_custom_call.1} parent=5 // pred_region
        %s307 = ssub.s32 %s21, 1
        %s308 = sand.u32 %s34, 1
        %s309 = scalar_lea.sflag [#allocation3], %s308
        %s310 = sand.u32 %s34, 1
        %s311 = smul.addr %s310, 48
        %s312 = scalar_lea.vmem [#allocation2], %s311
        // Predicated region
        $region53: #{tpu_custom_call.1} parent=51 // pred_check
          %p313 = pneg %p47
        $region54: #{tpu_custom_call.1} parent=51 // pred_check_branch
          %315 = sbr.rel (%p313) target = $region56
        $region55: #{tpu_custom_call.1} parent=51 // pred_region
          %316 = dma.done %s309, 768
        $region56: #{tpu_custom_call.1} parent=51 // pred_fallthru
          _
        // Predicated region
        $region57: #{tpu_custom_call.1} parent=51 // pred_check
          %p317 = pneg %p110
        $region58: #{tpu_custom_call.1} parent=51 // pred_check_branch
          %319 = sbr.rel (%p317) target = $region60
        $region59: #{tpu_custom_call.1} parent=51 // pred_region
          %320 = dma.done [#allocation6], 768
        $region60: #{tpu_custom_call.1} parent=51 // pred_fallthru
          _
        // Predicated region
        $region61: #{tpu_custom_call.1} parent=51 // pred_check
          %p321 = pneg %p131
        $region62: #{tpu_custom_call.1} parent=51 // pred_check_branch
          %323 = sbr.rel (%p321) target = $region64
        $region63: #{tpu_custom_call.1} parent=51 // pred_region
          %324 = dma.done [#allocation6], 256
        $region64: #{tpu_custom_call.1} parent=51 // pred_fallthru
          _
        %s325 = sand.u32 %s34, 1
        %s326 = scalar_lea.sflag [#allocation3], %s325
        %s327 = sand.u32 %s34, 1
        %s328 = smul.addr %s327, 48
        %s329 = scalar_lea.vmem [#allocation2], %s328
        %p330 = pneg %p47
        %p331 = pneg %p44
        %p332 = pneg %p68
        %p333 = pneg %p65
        %p334 = pneg %p89
        %p335 = pneg %p86
        %p336 = pneg %p110
        %p337 = pneg %p107
        %p338 = pneg %p131
        %p339 = pneg %p128
        %p340 = pneg %p152
        %p341 = pneg %p149
        %p342 = pneg %p173
        %p343 = pneg %p170
        %p344 = pneg %p194
        %p345 = pneg %p191
        %p346 = pneg %p220
        %p347 = pneg %p217
        %s348 = sand.u32 %s207, 1
        %s349 = scalar_lea.sflag [#allocation4], %s348
        %s350 = sand.u32 %s207, 1
        %s351 = smul.addr %s350, 16
        %s352 = scalar_lea.vmem [#allocation8], %s351
        %v353 = vld [vmem:[%s312] sm:$0xff]
        %v354 = vld [vmem:[%s312 + $0x8] sm:$0xff]
        %v355 = vld [vmem:[%s312 + $0x10] sm:$0xff]
        %v356 = vld [vmem:[%s312 + $0x18] sm:$0xff]
        %v357 = vld [vmem:[%s312 + $0x20] sm:$0xff]
        %v358 = vld [vmem:[%s312 + $0x28] sm:$0xff]
        %v359 = vld [vmem:[%s1] sm:$0x3]
        %v360 = vld [vmem:[%s2] sm:$0xff]
        %v361 = vld [vmem:[%s2 + $0x8] sm:$0xff]
        %s362 = scalar_lea.vmem %s2, 16
        %v363 = vld [vmem:[%s362] sm:$0xff]
        %v364 = vld [vmem:[%s362 + $0x8] sm:$0xff]
        %371 = vrot.lane.b32.xlu0 %v353, 126
        %v372 = vpop.permute.xlu0 %371
        %373 = vrot.lane.b32.xlu0 %v354, 126
        %v374 = vpop.permute.xlu0 %373
        %375 = vrot.lane.b32.xlu0 %v355, 126
        %v376 = vpop.permute.xlu0 %375
        %377 = vrot.lane.b32.xlu0 %v356, 126
        %v378 = vpop.permute.xlu0 %377
        %379 = vrot.lane.b32.xlu0 %v357, 126
        %v380 = vpop.permute.xlu0 %379
        %381 = vrot.lane.b32.xlu0 %v358, 126
        %v382 = vpop.permute.xlu0 %381
        %vm383 = vcmask 1031168
        %v384 = vsel %vm383, %v372, %v374
        %v385 = vsel %vm383, %v374, %v376
        %v386 = vsel %vm383, %v378, %v380
        %v387 = vsel %vm383, %v380, %v382
        %vm392 = vcmask 130048
        %v394 = vsel %vm392, %v363, 0
        %v397 = vsel %vm392, %v364, 0
        %399 = vmatprep.subr.mxu0 0.0
        %400 = vmatpush1.msra.mxu0 0.0
        %401 = vmatprep.subr.mxu0 0.0
        %402 = vmatpush1.msra.mxu0 0.0
        %403 = vmatprep.subr.mxu0 0.0
        %404 = vmatpush1.msra.mxu0 0.0
        %405 = vmatprep.subr.mxu0 0.0
        %406 = vmatpush1.msra.mxu0 0.0
        %407 = vmatprep.subr.mxu0 0.0
        %408 = vmatpush1.msra.mxu0 0.0
        %409 = vmatprep.subr.mxu0 0.0
        %410 = vmatpush1.msra.mxu0 0.0
        %411 = vmatprep.subr.mxu0 0.0
        %412 = vmatpush1.msra.mxu0 0.0
        %413 = vmatprep.subr.mxu0 0.0
        %414 = vmatpush1.msra.mxu0 0.0
        %415 = vmatprep.subr.mxu0 0.0
        %416 = vmatpush1.msra.mxu0 0.0
        %417 = vmatprep.subr.mxu0 0.0
        %418 = vmatpush1.msra.mxu0 0.0
        %419 = vmatprep.subr.mxu0 0.0
        %420 = vmatpush1.msra.mxu0 0.0
        %421 = vmatprep.subr.mxu0 0.0
        %422 = vmatpush1.msra.mxu0 0.0
        %423 = vmatprep.subr.mxu0 0.0
        %424 = vmatpush1.msra.mxu0 0.0
        %425 = vmatprep.subr.mxu0 0.0
        %426 = vmatpush1.msra.mxu0 0.0
        %427 = vmatprep.subr.mxu0 %v387
        %428 = vmatpush1.msra.mxu0 %v386
        %429 = vmatprep.subr.mxu0 %v385
        %430 = vmatpush1.msra.mxu0 %v384
        %431 = vmatprep.subr.mxu0 0.0
        %432 = vmatpush2.msra.mxu0 0.0
        %433 = vmatprep.subr.mxu0 0.0
        %434 = vmatpush2.msra.mxu0 0.0
        %435 = vmatprep.subr.mxu0 0.0
        %436 = vmatpush2.msra.mxu0 0.0
        %437 = vmatprep.subr.mxu0 0.0
        %438 = vmatpush2.msra.mxu0 0.0
        %439 = vmatprep.subr.mxu0 0.0
        %440 = vmatpush2.msra.mxu0 0.0
        %441 = vmatprep.subr.mxu0 0.0
        %442 = vmatpush2.msra.mxu0 0.0
        %443 = vmatprep.subr.mxu0 0.0
        %444 = vmatpush2.msra.mxu0 0.0
        %445 = vmatprep.subr.mxu0 0.0
        %446 = vmatpush2.msra.mxu0 0.0
        %447 = vmatprep.subr.mxu0 0.0
        %448 = vmatpush2.msra.mxu0 0.0
        %449 = vmatprep.subr.mxu0 0.0
        %450 = vmatpush2.msra.mxu0 0.0
        %451 = vmatprep.subr.mxu0 0.0
        %452 = vmatpush2.msra.mxu0 0.0
        %453 = vmatprep.subr.mxu0 0.0
        %454 = vmatpush2.msra.mxu0 0.0
        %455 = vmatprep.subr.mxu0 0.0
        %456 = vmatpush2.msra.mxu0 0.0
        %457 = vmatprep.subr.mxu0 0.0
        %458 = vmatpush2.msra.mxu0 0.0
        %459 = vmatprep.subr.mxu0 0.0
        %460 = vmatpush2.msra.mxu0 0.0
        %461 = vmatprep.subr.mxu0 0.0
        %462 = vmatpush2.msra.mxu0 0.0
        %463 = vmatprep.mubr.f32.mxu0 0.0
        %464 = vmatmul.mubr.f32.gmra.mxu0 %v394
        %v465 = vpop.f32.mrf.mxu0
        %v466 = vadd.f32 0.0, %v465
        %v467 = vpop.f32.mrf.mxu0
        %v468 = vadd.f32 0.0, %v467
        %469 = vmatprep.mubr.f32.mxu0 0.0
        %470 = vmatmul.mubr.f32.gmra.mxu0 %v397
        %v471 = vpop.f32.mrf.mxu0
        %v472 = vadd.f32 0.0, %v471
        %v473 = vpop.f32.mrf.mxu0
        %v474 = vadd.f32 0.0, %v473
        %475 = vdwg.mxu0
        %v477 = vsel %vm392, %v360, 0
        %v480 = vsel %vm392, %v361, 0
        %482 = vmatprep.subr.mxu0 0.0
        %483 = vmatpush1.msra.mxu0 0.0
        %484 = vmatprep.subr.mxu0 0.0
        %485 = vmatpush1.msra.mxu0 0.0
        %486 = vmatprep.subr.mxu0 0.0
        %487 = vmatpush1.msra.mxu0 0.0
        %488 = vmatprep.subr.mxu0 0.0
        %489 = vmatpush1.msra.mxu0 0.0
        %490 = vmatprep.subr.mxu0 0.0
        %491 = vmatpush1.msra.mxu0 0.0
        %492 = vmatprep.subr.mxu0 0.0
        %493 = vmatpush1.msra.mxu0 0.0
        %494 = vmatprep.subr.mxu0 0.0
        %495 = vmatpush1.msra.mxu0 0.0
        %496 = vmatprep.subr.mxu0 0.0
        %497 = vmatpush1.msra.mxu0 0.0
        %498 = vmatprep.subr.mxu0 0.0
        %499 = vmatpush1.msra.mxu0 0.0
        %500 = vmatprep.subr.mxu0 0.0
        %501 = vmatpush1.msra.mxu0 0.0
        %502 = vmatprep.subr.mxu0 0.0
        %503 = vmatpush1.msra.mxu0 0.0
        %504 = vmatprep.subr.mxu0 0.0
        %505 = vmatpush1.msra.mxu0 0.0
        %506 = vmatprep.subr.mxu0 0.0
        %507 = vmatpush1.msra.mxu0 0.0
        %508 = vmatprep.subr.mxu0 0.0
        %509 = vmatpush1.msra.mxu0 0.0
        %510 = vmatprep.subr.mxu0 %v357
        %511 = vmatpush1.msra.mxu0 %v356
        %512 = vmatprep.subr.mxu0 %v354
        %513 = vmatpush1.msra.mxu0 %v353
        %514 = vmatprep.subr.mxu0 0.0
        %515 = vmatpush2.msra.mxu0 0.0
        %516 = vmatprep.subr.mxu0 0.0
        %517 = vmatpush2.msra.mxu0 0.0
        %518 = vmatprep.subr.mxu0 0.0
        %519 = vmatpush2.msra.mxu0 0.0
        %520 = vmatprep.subr.mxu0 0.0
        %521 = vmatpush2.msra.mxu0 0.0
        %522 = vmatprep.subr.mxu0 0.0
        %523 = vmatpush2.msra.mxu0 0.0
        %524 = vmatprep.subr.mxu0 0.0
        %525 = vmatpush2.msra.mxu0 0.0
        %526 = vmatprep.subr.mxu0 0.0
        %527 = vmatpush2.msra.mxu0 0.0
        %528 = vmatprep.subr.mxu0 0.0
        %529 = vmatpush2.msra.mxu0 0.0
        %530 = vmatprep.subr.mxu0 0.0
        %531 = vmatpush2.msra.mxu0 0.0
        %532 = vmatprep.subr.mxu0 0.0
        %533 = vmatpush2.msra.mxu0 0.0
        %534 = vmatprep.subr.mxu0 0.0
        %535 = vmatpush2.msra.mxu0 0.0
        %536 = vmatprep.subr.mxu0 0.0
        %537 = vmatpush2.msra.mxu0 0.0
        %538 = vmatprep.subr.mxu0 0.0
        %539 = vmatpush2.msra.mxu0 0.0
        %540 = vmatprep.subr.mxu0 0.0
        %541 = vmatpush2.msra.mxu0 0.0
        %542 = vmatprep.subr.mxu0 0.0
        %543 = vmatpush2.msra.mxu0 0.0
        %544 = vmatprep.subr.mxu0 0.0
        %545 = vmatpush2.msra.mxu0 0.0
        %546 = vmatprep.mubr.f32.mxu0 0.0
        %547 = vmatmul.mubr.f32.gmra.mxu0 %v477
        %v548 = vpop.f32.mrf.mxu0
        %v549 = vadd.f32 %v466, %v548
        %v550 = vpop.f32.mrf.mxu0
        %v551 = vadd.f32 %v468, %v550
        %552 = vmatprep.mubr.f32.mxu0 0.0
        %553 = vmatmul.mubr.f32.gmra.mxu0 %v480
        %v554 = vpop.f32.mrf.mxu0
        %v555 = vadd.f32 %v472, %v554
        %v556 = vpop.f32.mrf.mxu0
        %v557 = vadd.f32 %v474, %v556
        %558 = vdwg.mxu0
        %s559 = scalar_lea.vmem %s2, 32
        %v560 = vld [vmem:[%s559] sm:$0xff]
        %v561 = vld [vmem:[%s559 + $0x8] sm:$0xff]
        %562 = vrot.lane.b32.xlu0 %v353, 124
        %v563 = vpop.permute.xlu0 %562
        %564 = vrot.lane.b32.xlu0 %v354, 124
        %v565 = vpop.permute.xlu0 %564
        %566 = vrot.lane.b32.xlu0 %v355, 124
        %v567 = vpop.permute.xlu0 %566
        %568 = vrot.lane.b32.xlu0 %v356, 124
        %v569 = vpop.permute.xlu0 %568
        %570 = vrot.lane.b32.xlu0 %v357, 124
        %v571 = vpop.permute.xlu0 %570
        %572 = vrot.lane.b32.xlu0 %v358, 124
        %v573 = vpop.permute.xlu0 %572
        %vm574 = vcmask 1014784
        %v575 = vsel %vm574, %v563, %v565
        %v576 = vsel %vm574, %v565, %v567
        %v577 = vsel %vm574, %v569, %v571
        %v578 = vsel %vm574, %v571, %v573
        %v584 = vsel %vm392, %v560, 0
        %v587 = vsel %vm392, %v561, 0
        %589 = vmatprep.subr.mxu0 0.0
        %590 = vmatpush1.msra.mxu0 0.0
        %591 = vmatprep.subr.mxu0 0.0
        %592 = vmatpush1.msra.mxu0 0.0
        %593 = vmatprep.subr.mxu0 0.0
        %594 = vmatpush1.msra.mxu0 0.0
        %595 = vmatprep.subr.mxu0 0.0
        %596 = vmatpush1.msra.mxu0 0.0
        %597 = vmatprep.subr.mxu0 0.0
        %598 = vmatpush1.msra.mxu0 0.0
        %599 = vmatprep.subr.mxu0 0.0
        %600 = vmatpush1.msra.mxu0 0.0
        %601 = vmatprep.subr.mxu0 0.0
        %602 = vmatpush1.msra.mxu0 0.0
        %603 = vmatprep.subr.mxu0 0.0
        %604 = vmatpush1.msra.mxu0 0.0
        %605 = vmatprep.subr.mxu0 0.0
        %606 = vmatpush1.msra.mxu0 0.0
        %607 = vmatprep.subr.mxu0 0.0
        %608 = vmatpush1.msra.mxu0 0.0
        %609 = vmatprep.subr.mxu0 0.0
        %610 = vmatpush1.msra.mxu0 0.0
        %611 = vmatprep.subr.mxu0 0.0
        %612 = vmatpush1.msra.mxu0 0.0
        %613 = vmatprep.subr.mxu0 0.0
        %614 = vmatpush1.msra.mxu0 0.0
        %615 = vmatprep.subr.mxu0 0.0
        %616 = vmatpush1.msra.mxu0 0.0
        %617 = vmatprep.subr.mxu0 %v578
        %618 = vmatpush1.msra.mxu0 %v577
        %619 = vmatprep.subr.mxu0 %v576
        %620 = vmatpush1.msra.mxu0 %v575
        %621 = vmatprep.subr.mxu0 0.0
        %622 = vmatpush2.msra.mxu0 0.0
        %623 = vmatprep.subr.mxu0 0.0
        %624 = vmatpush2.msra.mxu0 0.0
        %625 = vmatprep.subr.mxu0 0.0
        %626 = vmatpush2.msra.mxu0 0.0
        %627 = vmatprep.subr.mxu0 0.0
        %628 = vmatpush2.msra.mxu0 0.0
        %629 = vmatprep.subr.mxu0 0.0
        %630 = vmatpush2.msra.mxu0 0.0
        %631 = vmatprep.subr.mxu0 0.0
        %632 = vmatpush2.msra.mxu0 0.0
        %633 = vmatprep.subr.mxu0 0.0
        %634 = vmatpush2.msra.mxu0 0.0
        %635 = vmatprep.subr.mxu0 0.0
        %636 = vmatpush2.msra.mxu0 0.0
        %637 = vmatprep.subr.mxu0 0.0
        %638 = vmatpush2.msra.mxu0 0.0
        %639 = vmatprep.subr.mxu0 0.0
        %640 = vmatpush2.msra.mxu0 0.0
        %641 = vmatprep.subr.mxu0 0.0
        %642 = vmatpush2.msra.mxu0 0.0
        %643 = vmatprep.subr.mxu0 0.0
        %644 = vmatpush2.msra.mxu0 0.0
        %645 = vmatprep.subr.mxu0 0.0
        %646 = vmatpush2.msra.mxu0 0.0
        %647 = vmatprep.subr.mxu0 0.0
        %648 = vmatpush2.msra.mxu0 0.0
        %649 = vmatprep.subr.mxu0 0.0
        %650 = vmatpush2.msra.mxu0 0.0
        %651 = vmatprep.subr.mxu0 0.0
        %652 = vmatpush2.msra.mxu0 0.0
        %653 = vmatprep.mubr.f32.mxu0 0.0
        %654 = vmatmul.mubr.f32.gmra.mxu0 %v584
        %v655 = vpop.f32.mrf.mxu0
        %v656 = vadd.f32 0.0, %v655
        %v657 = vpop.f32.mrf.mxu0
        %v658 = vadd.f32 0.0, %v657
        %659 = vmatprep.mubr.f32.mxu0 0.0
        %660 = vmatmul.mubr.f32.gmra.mxu0 %v587
        %v661 = vpop.f32.mrf.mxu0
        %v662 = vadd.f32 0.0, %v661
        %v663 = vpop.f32.mrf.mxu0
        %v664 = vadd.f32 0.0, %v663
        %665 = vdwg.mxu0
        %v666 = vadd.f32 %v549, %v656
        %v667 = vadd.f32 %v551, %v658
        %v668 = vadd.f32 %v555, %v662
        %v669 = vadd.f32 %v557, %v664
        %v670 = vld [vmem:[%s5] sm:$0xff]
        %v671 = vld [vmem:[%s5 + $0x8] sm:$0xff]
        %673 = vset.pattern.permute.xlu0 0
        %674 = vperm.xlu0 %673, %v670
        %v675 = vpop.permute.xlu0 %674
        %678 = vset.pattern.permute.xlu0 0
        %679 = vperm.xlu0 %678, %v671
        %v680 = vpop.permute.xlu0 %679
        %v682 = vadd.f32 %v666, %v675
        %v683 = vadd.f32 %v667, %v675
        %v684 = vadd.f32 %v668, %v680
        %v685 = vadd.f32 %v669, %v680
        %v686 = vmax.f32 %v682, 0.0
        %v687 = vmax.f32 %v683, 0.0
        %v688 = vmax.f32 %v684, 0.0
        %v689 = vmax.f32 %v685, 0.0
        %v691 = vlaneseq
        %v692 = vshrl.u32 %v691, 7
        %v693 = vsub.s32 0, %v692
        %v694 = vrot.slane %v359, %v693
        %v695 = vlaneseq
        %v696 = vshrl.u32 %v695, 7
        %v697 = vsub.s32 1, %v696
        %v698 = vrot.slane %v359, %v697
        %v701 = vmul.f32 %v686, %v694
        %v702 = vmul.f32 %v687, %v698
        %v703 = vmul.f32 %v688, %v694
        %v704 = vmul.f32 %v689, %v698
        %v705 = vld [vmem:[#allocation5] sm:$0xff]
        %v706 = vld [vmem:[#allocation5 + $0x8] sm:$0xff]
        %s707 = scalar_lea.vmem [#allocation5], 16
        %v708 = vld [vmem:[%s707] sm:$0xff]
        %v709 = vld [vmem:[%s707 + $0x8] sm:$0xff]
        %714 = vrot.lane.b32.xlu0 %v701, 126
        %v715 = vpop.permute.xlu0 %714
        %716 = vrot.lane.b32.xlu0 %v702, 126
        %v717 = vpop.permute.xlu0 %716
        %718 = vrot.lane.b32.xlu0 %v703, 126
        %v719 = vpop.permute.xlu0 %718
        %720 = vrot.lane.b32.xlu0 %v704, 126
        %v721 = vpop.permute.xlu0 %720
        %v722 = vsel %vm383, %v715, %v717
        %v723 = vsel %vm383, %v719, %v721
        %v727 = vsel %vm392, %v708, 0
        %v730 = vsel %vm392, %v709, 0
        %732 = vmatprep.subr.mxu0 0.0
        %733 = vmatpush1.msra.mxu0 0.0
        %734 = vmatprep.subr.mxu0 0.0
        %735 = vmatpush1.msra.mxu0 0.0
        %736 = vmatprep.subr.mxu0 0.0
        %737 = vmatpush1.msra.mxu0 0.0
        %738 = vmatprep.subr.mxu0 0.0
        %739 = vmatpush1.msra.mxu0 0.0
        %740 = vmatprep.subr.mxu0 0.0
        %741 = vmatpush1.msra.mxu0 0.0
        %742 = vmatprep.subr.mxu0 0.0
        %743 = vmatpush1.msra.mxu0 0.0
        %744 = vmatprep.subr.mxu0 0.0
        %745 = vmatpush1.msra.mxu0 0.0
        %746 = vmatprep.subr.mxu0 0.0
        %747 = vmatpush1.msra.mxu0 0.0
        %748 = vmatprep.subr.mxu0 0.0
        %749 = vmatpush1.msra.mxu0 0.0
        %750 = vmatprep.subr.mxu0 0.0
        %751 = vmatpush1.msra.mxu0 0.0
        %752 = vmatprep.subr.mxu0 0.0
        %753 = vmatpush1.msra.mxu0 0.0
        %754 = vmatprep.subr.mxu0 0.0
        %755 = vmatpush1.msra.mxu0 0.0
        %756 = vmatprep.subr.mxu0 0.0
        %757 = vmatpush1.msra.mxu0 0.0
        %758 = vmatprep.subr.mxu0 0.0
        %759 = vmatpush1.msra.mxu0 0.0
        %760 = vmatprep.subr.mxu0 0.0
        %761 = vmatpush1.msra.mxu0 %v723
        %762 = vmatprep.subr.mxu0 0.0
        %763 = vmatpush1.msra.mxu0 %v722
        %764 = vmatprep.subr.mxu0 0.0
        %765 = vmatpush2.msra.mxu0 0.0
        %766 = vmatprep.subr.mxu0 0.0
        %767 = vmatpush2.msra.mxu0 0.0
        %768 = vmatprep.subr.mxu0 0.0
        %769 = vmatpush2.msra.mxu0 0.0
        %770 = vmatprep.subr.mxu0 0.0
        %771 = vmatpush2.msra.mxu0 0.0
        %772 = vmatprep.subr.mxu0 0.0
        %773 = vmatpush2.msra.mxu0 0.0
        %774 = vmatprep.subr.mxu0 0.0
        %775 = vmatpush2.msra.mxu0 0.0
        %776 = vmatprep.subr.mxu0 0.0
        %777 = vmatpush2.msra.mxu0 0.0
        %778 = vmatprep.subr.mxu0 0.0
        %779 = vmatpush2.msra.mxu0 0.0
        %780 = vmatprep.subr.mxu0 0.0
        %781 = vmatpush2.msra.mxu0 0.0
        %782 = vmatprep.subr.mxu0 0.0
        %783 = vmatpush2.msra.mxu0 0.0
        %784 = vmatprep.subr.mxu0 0.0
        %785 = vmatpush2.msra.mxu0 0.0
        %786 = vmatprep.subr.mxu0 0.0
        %787 = vmatpush2.msra.mxu0 0.0
        %788 = vmatprep.subr.mxu0 0.0
        %789 = vmatpush2.msra.mxu0 0.0
        %790 = vmatprep.subr.mxu0 0.0
        %791 = vmatpush2.msra.mxu0 0.0
        %792 = vmatprep.subr.mxu0 0.0
        %793 = vmatpush2.msra.mxu0 0.0
        %794 = vmatprep.subr.mxu0 0.0
        %795 = vmatpush2.msra.mxu0 0.0
        %796 = vmatprep.mubr.f32.mxu0 0.0
        %797 = vmatmul.mubr.f32.gmra.mxu0 %v727
        %v798 = vpop.f32.mrf.mxu0
        %v799 = vadd.f32 0.0, %v798
        %v800 = vpop.f32.mrf.mxu0
        %801 = vmatprep.mubr.f32.mxu0 0.0
        %802 = vmatmul.mubr.f32.gmra.mxu0 %v730
        %v803 = vpop.f32.mrf.mxu0
        %v804 = vadd.f32 0.0, %v803
        %v805 = vpop.f32.mrf.mxu0
        %806 = vdwg.mxu0
        %v808 = vsel %vm392, %v705, 0
        %v811 = vsel %vm392, %v706, 0
        %813 = vmatprep.subr.mxu0 0.0
        %814 = vmatpush1.msra.mxu0 0.0
        %815 = vmatprep.subr.mxu0 0.0
        %816 = vmatpush1.msra.mxu0 0.0
        %817 = vmatprep.subr.mxu0 0.0
        %818 = vmatpush1.msra.mxu0 0.0
        %819 = vmatprep.subr.mxu0 0.0
        %820 = vmatpush1.msra.mxu0 0.0
        %821 = vmatprep.subr.mxu0 0.0
        %822 = vmatpush1.msra.mxu0 0.0
        %823 = vmatprep.subr.mxu0 0.0
        %824 = vmatpush1.msra.mxu0 0.0
        %825 = vmatprep.subr.mxu0 0.0
        %826 = vmatpush1.msra.mxu0 0.0
        %827 = vmatprep.subr.mxu0 0.0
        %828 = vmatpush1.msra.mxu0 0.0
        %829 = vmatprep.subr.mxu0 0.0
        %830 = vmatpush1.msra.mxu0 0.0
        %831 = vmatprep.subr.mxu0 0.0
        %832 = vmatpush1.msra.mxu0 0.0
        %833 = vmatprep.subr.mxu0 0.0
        %834 = vmatpush1.msra.mxu0 0.0
        %835 = vmatprep.subr.mxu0 0.0
        %836 = vmatpush1.msra.mxu0 0.0
        %837 = vmatprep.subr.mxu0 0.0
        %838 = vmatpush1.msra.mxu0 0.0
        %839 = vmatprep.subr.mxu0 0.0
        %840 = vmatpush1.msra.mxu0 0.0
        %841 = vmatprep.subr.mxu0 0.0
        %842 = vmatpush1.msra.mxu0 %v703
        %843 = vmatprep.subr.mxu0 0.0
        %844 = vmatpush1.msra.mxu0 %v701
        %845 = vmatprep.subr.mxu0 0.0
        %846 = vmatpush2.msra.mxu0 0.0
        %847 = vmatprep.subr.mxu0 0.0
        %848 = vmatpush2.msra.mxu0 0.0
        %849 = vmatprep.subr.mxu0 0.0
        %850 = vmatpush2.msra.mxu0 0.0
        %851 = vmatprep.subr.mxu0 0.0
        %852 = vmatpush2.msra.mxu0 0.0
        %853 = vmatprep.subr.mxu0 0.0
        %854 = vmatpush2.msra.mxu0 0.0
        %855 = vmatprep.subr.mxu0 0.0
        %856 = vmatpush2.msra.mxu0 0.0
        %857 = vmatprep.subr.mxu0 0.0
        %858 = vmatpush2.msra.mxu0 0.0
        %859 = vmatprep.subr.mxu0 0.0
        %860 = vmatpush2.msra.mxu0 0.0
        %861 = vmatprep.subr.mxu0 0.0
        %862 = vmatpush2.msra.mxu0 0.0
        %863 = vmatprep.subr.mxu0 0.0
        %864 = vmatpush2.msra.mxu0 0.0
        %865 = vmatprep.subr.mxu0 0.0
        %866 = vmatpush2.msra.mxu0 0.0
        %867 = vmatprep.subr.mxu0 0.0
        %868 = vmatpush2.msra.mxu0 0.0
        %869 = vmatprep.subr.mxu0 0.0
        %870 = vmatpush2.msra.mxu0 0.0
        %871 = vmatprep.subr.mxu0 0.0
        %872 = vmatpush2.msra.mxu0 0.0
        %873 = vmatprep.subr.mxu0 0.0
        %874 = vmatpush2.msra.mxu0 0.0
        %875 = vmatprep.subr.mxu0 0.0
        %876 = vmatpush2.msra.mxu0 0.0
        %877 = vmatprep.mubr.f32.mxu0 0.0
        %878 = vmatmul.mubr.f32.gmra.mxu0 %v808
        %v879 = vpop.f32.mrf.mxu0
        %v880 = vadd.f32 %v799, %v879
        %v881 = vpop.f32.mrf.mxu0
        %882 = vmatprep.mubr.f32.mxu0 0.0
        %883 = vmatmul.mubr.f32.gmra.mxu0 %v811
        %v884 = vpop.f32.mrf.mxu0
        %v885 = vadd.f32 %v804, %v884
        %v886 = vpop.f32.mrf.mxu0
        %887 = vdwg.mxu0
        %s888 = scalar_lea.vmem [#allocation5], 32
        %v889 = vld [vmem:[%s888] sm:$0xff]
        %v890 = vld [vmem:[%s888 + $0x8] sm:$0xff]
        %891 = vrot.lane.b32.xlu0 %v701, 124
        %v892 = vpop.permute.xlu0 %891
        %893 = vrot.lane.b32.xlu0 %v702, 124
        %v894 = vpop.permute.xlu0 %893
        %895 = vrot.lane.b32.xlu0 %v703, 124
        %v896 = vpop.permute.xlu0 %895
        %897 = vrot.lane.b32.xlu0 %v704, 124
        %v898 = vpop.permute.xlu0 %897
        %v899 = vsel %vm574, %v892, %v894
        %v900 = vsel %vm574, %v896, %v898
        %v904 = vsel %vm392, %v889, 0
        %v907 = vsel %vm392, %v890, 0
        %909 = vmatprep.subr.mxu0 0.0
        %910 = vmatpush1.msra.mxu0 0.0
        %911 = vmatprep.subr.mxu0 0.0
        %912 = vmatpush1.msra.mxu0 0.0
        %913 = vmatprep.subr.mxu0 0.0
        %914 = vmatpush1.msra.mxu0 0.0
        %915 = vmatprep.subr.mxu0 0.0
        %916 = vmatpush1.msra.mxu0 0.0
        %917 = vmatprep.subr.mxu0 0.0
        %918 = vmatpush1.msra.mxu0 0.0
        %919 = vmatprep.subr.mxu0 0.0
        %920 = vmatpush1.msra.mxu0 0.0
        %921 = vmatprep.subr.mxu0 0.0
        %922 = vmatpush1.msra.mxu0 0.0
        %923 = vmatprep.subr.mxu0 0.0
        %924 = vmatpush1.msra.mxu0 0.0
        %925 = vmatprep.subr.mxu0 0.0
        %926 = vmatpush1.msra.mxu0 0.0
        %927 = vmatprep.subr.mxu0 0.0
        %928 = vmatpush1.msra.mxu0 0.0
        %929 = vmatprep.subr.mxu0 0.0
        %930 = vmatpush1.msra.mxu0 0.0
        %931 = vmatprep.subr.mxu0 0.0
        %932 = vmatpush1.msra.mxu0 0.0
        %933 = vmatprep.subr.mxu0 0.0
        %934 = vmatpush1.msra.mxu0 0.0
        %935 = vmatprep.subr.mxu0 0.0
        %936 = vmatpush1.msra.mxu0 0.0
        %937 = vmatprep.subr.mxu0 0.0
        %938 = vmatpush1.msra.mxu0 %v900
        %939 = vmatprep.subr.mxu0 0.0
        %940 = vmatpush1.msra.mxu0 %v899
        %941 = vmatprep.subr.mxu0 0.0
        %942 = vmatpush2.msra.mxu0 0.0
        %943 = vmatprep.subr.mxu0 0.0
        %944 = vmatpush2.msra.mxu0 0.0
        %945 = vmatprep.subr.mxu0 0.0
        %946 = vmatpush2.msra.mxu0 0.0
        %947 = vmatprep.subr.mxu0 0.0
        %948 = vmatpush2.msra.mxu0 0.0
        %949 = vmatprep.subr.mxu0 0.0
        %950 = vmatpush2.msra.mxu0 0.0
        %951 = vmatprep.subr.mxu0 0.0
        %952 = vmatpush2.msra.mxu0 0.0
        %953 = vmatprep.subr.mxu0 0.0
        %954 = vmatpush2.msra.mxu0 0.0
        %955 = vmatprep.subr.mxu0 0.0
        %956 = vmatpush2.msra.mxu0 0.0
        %957 = vmatprep.subr.mxu0 0.0
        %958 = vmatpush2.msra.mxu0 0.0
        %959 = vmatprep.subr.mxu0 0.0
        %960 = vmatpush2.msra.mxu0 0.0
        %961 = vmatprep.subr.mxu0 0.0
        %962 = vmatpush2.msra.mxu0 0.0
        %963 = vmatprep.subr.mxu0 0.0
        %964 = vmatpush2.msra.mxu0 0.0
        %965 = vmatprep.subr.mxu0 0.0
        %966 = vmatpush2.msra.mxu0 0.0
        %967 = vmatprep.subr.mxu0 0.0
        %968 = vmatpush2.msra.mxu0 0.0
        %969 = vmatprep.subr.mxu0 0.0
        %970 = vmatpush2.msra.mxu0 0.0
        %971 = vmatprep.subr.mxu0 0.0
        %972 = vmatpush2.msra.mxu0 0.0
        %973 = vmatprep.mubr.f32.mxu0 0.0
        %974 = vmatmul.mubr.f32.gmra.mxu0 %v904
        %v975 = vpop.f32.mrf.mxu0
        %v976 = vadd.f32 0.0, %v975
        %v977 = vpop.f32.mrf.mxu0
        %978 = vmatprep.mubr.f32.mxu0 0.0
        %979 = vmatmul.mubr.f32.gmra.mxu0 %v907
        %v980 = vpop.f32.mrf.mxu0
        %v981 = vadd.f32 0.0, %v980
        %v982 = vpop.f32.mrf.mxu0
        %983 = vdwg.mxu0
        %v984 = vadd.f32 %v880, %v976
        %v985 = vadd.f32 %v885, %v981
        %v986 = vld [vmem:[%s6] sm:$0xff]
        %v987 = vld [vmem:[%s6 + $0x8] sm:$0xff]
        %989 = vset.pattern.permute.xlu0 0
        %990 = vperm.xlu0 %989, %v986
        %v991 = vpop.permute.xlu0 %990
        %994 = vset.pattern.permute.xlu0 0
        %995 = vperm.xlu0 %994, %v987
        %v996 = vpop.permute.xlu0 %995
        %v998 = vadd.f32 %v984, %v991
        %v999 = vadd.f32 %v985, %v996
        %v1000 = vmax.f32 %v998, 0.0
        %v1001 = vmax.f32 %v999, 0.0
        %v1002 = vld [vmem:[#allocation7] sm:$0xff]
        %v1003 = vld [vmem:[#allocation7 + $0x8] sm:$0xff]
        %v1004 = vld [vmem:[%s7] sm:$0xff]
        %v1005 = vld [vmem:[%s7 + $0x8] sm:$0xff]
        %1007 = vset.pattern.permute.xlu0 0
        %1008 = vperm.xlu0 %1007, %v1004
        %v1009 = vpop.permute.xlu0 %1008
        %1012 = vset.pattern.permute.xlu0 0
        %1013 = vperm.xlu0 %1012, %v1005
        %v1014 = vpop.permute.xlu0 %1013
        %v1017 = vsel %vm392, %v1002, 0
        %v1020 = vsel %vm392, %v1003, 0
        %1022 = vmatprep.subr.mxu0 0.0
        %1023 = vmatpush1.msra.mxu0 0.0
        %1024 = vmatprep.subr.mxu0 0.0
        %1025 = vmatpush1.msra.mxu0 0.0
        %1026 = vmatprep.subr.mxu0 0.0
        %1027 = vmatpush1.msra.mxu0 0.0
        %1028 = vmatprep.subr.mxu0 0.0
        %1029 = vmatpush1.msra.mxu0 0.0
        %1030 = vmatprep.subr.mxu0 0.0
        %1031 = vmatpush1.msra.mxu0 0.0
        %1032 = vmatprep.subr.mxu0 0.0
        %1033 = vmatpush1.msra.mxu0 0.0
        %1034 = vmatprep.subr.mxu0 0.0
        %1035 = vmatpush1.msra.mxu0 0.0
        %1036 = vmatprep.subr.mxu0 0.0
        %1037 = vmatpush1.msra.mxu0 0.0
        %1038 = vmatprep.subr.mxu0 0.0
        %1039 = vmatpush1.msra.mxu0 0.0
        %1040 = vmatprep.subr.mxu0 0.0
        %1041 = vmatpush1.msra.mxu0 0.0
        %1042 = vmatprep.subr.mxu0 0.0
        %1043 = vmatpush1.msra.mxu0 0.0
        %1044 = vmatprep.subr.mxu0 0.0
        %1045 = vmatpush1.msra.mxu0 0.0
        %1046 = vmatprep.subr.mxu0 0.0
        %1047 = vmatpush1.msra.mxu0 0.0
        %1048 = vmatprep.subr.mxu0 0.0
        %1049 = vmatpush1.msra.mxu0 0.0
        %1050 = vmatprep.subr.mxu0 0.0
        %1051 = vmatpush1.msra.mxu0 %v577
        %1052 = vmatprep.subr.mxu0 0.0
        %1053 = vmatpush1.msra.mxu0 %v575
        %1054 = vmatprep.subr.mxu0 0.0
        %1055 = vmatpush2.msra.mxu0 0.0
        %1056 = vmatprep.subr.mxu0 0.0
        %1057 = vmatpush2.msra.mxu0 0.0
        %1058 = vmatprep.subr.mxu0 0.0
        %1059 = vmatpush2.msra.mxu0 0.0
        %1060 = vmatprep.subr.mxu0 0.0
        %1061 = vmatpush2.msra.mxu0 0.0
        %1062 = vmatprep.subr.mxu0 0.0
        %1063 = vmatpush2.msra.mxu0 0.0
        %1064 = vmatprep.subr.mxu0 0.0
        %1065 = vmatpush2.msra.mxu0 0.0
        %1066 = vmatprep.subr.mxu0 0.0
        %1067 = vmatpush2.msra.mxu0 0.0
        %1068 = vmatprep.subr.mxu0 0.0
        %1069 = vmatpush2.msra.mxu0 0.0
        %1070 = vmatprep.subr.mxu0 0.0
        %1071 = vmatpush2.msra.mxu0 0.0
        %1072 = vmatprep.subr.mxu0 0.0
        %1073 = vmatpush2.msra.mxu0 0.0
        %1074 = vmatprep.subr.mxu0 0.0
        %1075 = vmatpush2.msra.mxu0 0.0
        %1076 = vmatprep.subr.mxu0 0.0
        %1077 = vmatpush2.msra.mxu0 0.0
        %1078 = vmatprep.subr.mxu0 0.0
        %1079 = vmatpush2.msra.mxu0 0.0
        %1080 = vmatprep.subr.mxu0 0.0
        %1081 = vmatpush2.msra.mxu0 0.0
        %1082 = vmatprep.subr.mxu0 0.0
        %1083 = vmatpush2.msra.mxu0 0.0
        %1084 = vmatprep.subr.mxu0 0.0
        %1085 = vmatpush2.msra.mxu0 0.0
        %1086 = vmatprep.mubr.f32.mxu0 0.0
        %1087 = vmatmul.mubr.f32.gmra.mxu0 %v1017
        %v1088 = vpop.f32.mrf.mxu0
        %v1089 = vadd.f32 %v1009, %v1088
        %v1090 = vpop.f32.mrf.mxu0
        %1091 = vmatprep.mubr.f32.mxu0 0.0
        %1092 = vmatmul.mubr.f32.gmra.mxu0 %v1020
        %v1093 = vpop.f32.mrf.mxu0
        %v1094 = vadd.f32 %v1014, %v1093
        %v1095 = vpop.f32.mrf.mxu0
        %1096 = vdwg.mxu0
        %v1097 = vadd.f32 %v1000, %v1089
        %v1098 = vadd.f32 %v1001, %v1094
        %v1099 = vmax.f32 %v1097, 0.0
        %v1100 = vmax.f32 %v1098, 0.0
        %1101 = vst [vmem:[%s352] sm:$0xff] %v1099
        %1102 = vst [vmem:[%s352 + $0x8] sm:$0xff] %v1100
        %s1103 = sand.u32 %s207, 1
        %s1104 = scalar_lea.sflag [#allocation4], %s1103
        %s1105 = sand.u32 %s207, 1
        %s1106 = smul.addr %s1105, 16
        %s1107 = scalar_lea.vmem [#allocation8], %s1106
        // Predicated region
        $region65: #{tpu_custom_call.1} parent=51 // pred_check
          %p1108 = pneg %p217
        $region66: #{tpu_custom_call.1} parent=51 // pred_check_branch
          %1110 = sbr.rel (%p1108) target = $region68
        $region67: #{tpu_custom_call.1} parent=51 // pred_region
          %s1112 = ssub.s32 256, 256
          %1113 = vsyncadd %s1104, %s1112
          %s1114 = smul.addr %s26, 2
          %s1115 = smul.addr %s1114, 128
          %s1116 = scalar_lea.hbm %s8, %s1115
          %s1117 = sshll.u32 %s1107, 4
          %s1118 = int_to_ptr.vmem [resolvable:$true] %s1117
          %1123 = dma.vmem_to_hbm [thread:$0]  %s1118, 256, %s1116, %s1104, 128, 128, 8
        $region68: #{tpu_custom_call.1} parent=51 // pred_fallthru
          _
      $region52: #{tpu_custom_call.1} parent=5 // pred_fallthru
        _
      %p1124 = scmp.le.s32.totalorder 2, %s21
      // Predicated region
      $region69: #{tpu_custom_call.1} parent=5 // pred_check
        %p1125 = pneg %p1124
      $region70: #{tpu_custom_call.1} parent=5 // pred_check_branch
        %1127 = sbr.rel (%p1125) target = $region72
      $region71: #{tpu_custom_call.1} parent=5 // pred_region
        %s1128 = ssub.s32 %s21, 2
        // Predicated region
        $region73: #{tpu_custom_call.1} parent=71 // pred_check
          %p1129 = pneg %p223
        $region74: #{tpu_custom_call.1} parent=71 // pred_check_branch
          %1131 = sbr.rel (%p1129) target = $region76
        $region75: #{tpu_custom_call.1} parent=71 // pred_region
          %s1132 = sand.u32 %s208, 1
          %s1133 = scalar_lea.sflag [#allocation4], %s1132
          %s1134 = sand.u32 %s208, 1
          %s1135 = smul.addr %s1134, 16
          %s1136 = scalar_lea.vmem [#allocation8], %s1135
          %1137 = dma.done %s1133, 256
        $region76: #{tpu_custom_call.1} parent=71 // pred_fallthru
          _
      $region72: #{tpu_custom_call.1} parent=5 // pred_fallthru
        _
    $region6: #{tpu_custom_call.1} parent=1 // loop_footer
      %s25 = sadd.s32 1, %s21
    $region7: #{tpu_custom_call.1} parent=1 // loop_footer_branch
      %20 = sbr.rel target = $region3
    $region8: #{tpu_custom_call.1} parent=1 // loop_exit
      _
    %1138 = vsyncpa [#allocation3], 1
    %s1139 = scalar_lea.sflag [#allocation3], 1
    %1140 = vsyncpa %s1139, 1
    %1141 = vsyncpa [#allocation6], 1
    %1142 = vsyncpa [#allocation4], 1
    %s1143 = scalar_lea.sflag [#allocation4], 1
    %1144 = vsyncpa %s1143, 1

</llo_original>
